<compile_context>
chip_gen: v7x
topology: tpu7x:2x2x1
jax: 0.10.0
libtpu: 0.0.40
codegen_flags: <defaults>
</compile_context>

<pallas_src>
import functools
import math

import jax
import jax.numpy as jnp
import numpy as np
from jax import lax
from jax.experimental import pallas as pl
from jax.experimental.pallas import tpu as pltpu

_MASK_VALUE = -1e30  # large finite negative: safe under exp(), no inf-inf NaN risk


def _qkv_proj_kernel(x_ref, w3_ref, q_ref, k_ref, v_ref, *, head_size):
    """Fused [q|k|v] projection for one (batch, head, row-tile)."""
    x = x_ref[0]                       # (tm, C)   bf16
    w3 = w3_ref[0]                     # (C, 3*hs) bf16 (softmax scale pre-folded into q cols)
    y = lax.dot_general(x, w3, (((1,), (0,)), ((), ())),
                        preferred_element_type=jnp.float32)        # (tm, 3*hs) f32
    q_ref[0, 0] = y[:, 0 * head_size:1 * head_size].astype(q_ref.dtype)
    k_ref[0, 0] = y[:, 1 * head_size:2 * head_size].astype(k_ref.dtype)
    v_ref[0, 0] = y[:, 2 * head_size:3 * head_size].astype(v_ref.dtype)


def _flash_attn_kernel(q_ref, k_ref, v_ref, o_ref, m_sc, l_sc, acc_sc, *, tq, tk):
    """Online-softmax attention for one (batch, head, q-tile, kv-tile) grid cell."""
    qi = pl.program_id(2)
    ki = pl.program_id(3)

    @pl.when(ki == 0)
    def _init():
        m_sc[...] = jnp.full_like(m_sc, _MASK_VALUE)
        l_sc[...] = jnp.zeros_like(l_sc)
        acc_sc[...] = jnp.zeros_like(acc_sc)

    q_start = qi * tq
    k_start = ki * tk

    # Causal block skipping: kv blocks entirely above the diagonal contribute nothing.
    @pl.when(k_start <= q_start + (tq - 1))
    def _compute():
        q = q_ref[0, 0]                                             # (tq, hs) bf16
        k = k_ref[0, 0]                                             # (tk, hs) bf16
        v = v_ref[0, 0]                                             # (tk, hs) bf16

        # q @ k^T with last-dim contraction (no materialized transpose).
        s = lax.dot_general(q, k, (((1,), (1,)), ((), ())),
                            preferred_element_type=jnp.float32)     # (tq, tk) f32

        row = q_start + lax.broadcasted_iota(jnp.int32, (tq, tk), 0)
        col = k_start + lax.broadcasted_iota(jnp.int32, (tq, tk), 1)
        s = jnp.where(row >= col, s, _MASK_VALUE)

        m_prev = m_sc[...]                                           # (tq, 1) f32
        m_new = jnp.maximum(m_prev, jnp.max(s, axis=-1, keepdims=True))
        alpha = jnp.exp(m_prev - m_new)
        p = jnp.exp(s - m_new)                                       # f32 exp (v5e-safe)

        l_sc[...] = alpha * l_sc[...] + jnp.sum(p, axis=-1, keepdims=True)
        acc_sc[...] = alpha * acc_sc[...] + lax.dot_general(
            p.astype(v.dtype), v, (((1,), (0,)), ((), ())),
            preferred_element_type=jnp.float32)
        m_sc[...] = m_new

    @pl.when(ki == pl.num_programs(3) - 1)
    def _finalize():
        inv_l = pl.reciprocal(l_sc[...], approx=True)
        o_ref[0, 0] = (acc_sc[...] * inv_l).astype(o_ref.dtype)


def _out_proj_kernel(yh_ref, wp_ref, bias_ref, o_ref, acc_ref):
    """Output projection: heads are the reduction axis; bias added once, single store."""
    h = pl.program_id(2)

    @pl.when(h == 0)
    def _init():
        acc_ref[...] = jnp.zeros_like(acc_ref)

    acc_ref[...] += lax.dot_general(yh_ref[0, 0], wp_ref[0],
                                    (((1,), (0,)), ((), ())),
                                    preferred_element_type=jnp.float32)

    @pl.when(h == pl.num_programs(2) - 1)
    def _finalize():
        o_ref[0] = (acc_ref[...] + bias_ref[...]).astype(o_ref.dtype)


def multi_head_attention(x, w_qkv_heads, w_proj_heads, bias, *,
                         q_block=128, kv_block=128,
                         out_dtype=jnp.float32,
                         vmem_limit_bytes=64 * 1024 * 1024):
    """
    x            : (B, T, C)     float32 or bfloat16 activations
    w_qkv_heads  : (H, C, 3*hs)  bfloat16; per-head columns [q | k | v], softmax scale
                                 (n_embd**-0.5) pre-folded into the q columns.
    w_proj_heads : (H, hs, C)    bfloat16; proj.weight.T reshaped head-major.
    bias         : (1, C)        float32 proj bias.
    returns (B, T, C) out_dtype
    """
    B, T, C = x.shape
    H, _, three_hs = w_qkv_heads.shape
    hs = three_hs // 3
    assert H * hs == C, "n_head * head_size must equal n_embd"

    x = x.astype(jnp.bfloat16)          # halves x DMA bytes and VMEM footprint

    tq = min(q_block, T)
    tk = min(kv_block, T)
    assert T % tq == 0 and T % tk == 0, "sequence length must tile evenly"
    num_q, num_kv = T // tq, T // tk

    def cparams(sem):
        # Per-generation tuning: raise above 64 MiB on v5e/v6e for bigger tiles.
        return pltpu.CompilerParams(dimension_semantics=sem,
                                    vmem_limit_bytes=vmem_limit_bytes)

    # ---- 1) fused per-head QKV projection -> q, k, v in (B, H, T, hs) bf16 ----
    q, k, v = pl.pallas_call(
        functools.partial(_qkv_proj_kernel, head_size=hs),
        out_shape=(
            jax.ShapeDtypeStruct((B, H, T, hs), jnp.bfloat16),
            jax.ShapeDtypeStruct((B, H, T, hs), jnp.bfloat16),
            jax.ShapeDtypeStruct((B, H, T, hs), jnp.bfloat16),
        ),
        grid_spec=pltpu.PrefetchScalarGridSpec(
            num_scalar_prefetch=0,
            grid=(B, H, num_q),
            in_specs=[
                pl.BlockSpec((1, tq, C), lambda b, h, m: (b, m, 0)),
                pl.BlockSpec((1, C, 3 * hs), lambda b, h, m: (h, 0, 0)),
            ],
            out_specs=(
                pl.BlockSpec((1, 1, tq, hs), lambda b, h, m: (b, h, m, 0)),
                pl.BlockSpec((1, 1, tq, hs), lambda b, h, m: (b, h, m, 0)),
                pl.BlockSpec((1, 1, tq, hs), lambda b, h, m: (b, h, m, 0)),
            ),
        ),
        compiler_params=cparams(("parallel", "parallel", "parallel")),
    )(x, w_qkv_heads)

    # ---- 2) flash attention: online softmax + causal block skipping ----
    y_heads = pl.pallas_call(
        functools.partial(_flash_attn_kernel, tq=tq, tk=tk),
        out_shape=jax.ShapeDtypeStruct((B, H, T, hs), jnp.bfloat16),
        grid_spec=pltpu.PrefetchScalarGridSpec(
            num_scalar_prefetch=0,
            grid=(B, H, num_q, num_kv),
            in_specs=[
                pl.BlockSpec((1, 1, tq, hs), lambda b, h, qi, ki: (b, h, qi, 0)),
                pl.BlockSpec((1, 1, tk, hs), lambda b, h, qi, ki: (b, h, ki, 0)),
                pl.BlockSpec((1, 1, tk, hs), lambda b, h, qi, ki: (b, h, ki, 0)),
            ],
            out_specs=pl.BlockSpec((1, 1, tq, hs), lambda b, h, qi, ki: (b, h, qi, 0)),
            scratch_shapes=[
                pltpu.VMEM((tq, 1), jnp.float32),    # m: running max
                pltpu.VMEM((tq, 1), jnp.float32),    # l: running denominator
                pltpu.VMEM((tq, hs), jnp.float32),   # acc: unnormalized output
            ],
        ),
        compiler_params=cparams(("parallel", "parallel", "parallel", "arbitrary")),
    )(q, k, v)

    # ---- 3) output projection (+ bias), heads as reduction axis: no concat ----
    out = pl.pallas_call(
        _out_proj_kernel,
        out_shape=jax.ShapeDtypeStruct((B, T, C), out_dtype),
        grid_spec=pltpu.PrefetchScalarGridSpec(
            num_scalar_prefetch=0,
            grid=(B, num_q, H),
            in_specs=[
                pl.BlockSpec((1, 1, tq, hs), lambda b, m, h: (b, h, m, 0)),
                pl.BlockSpec((1, hs, C), lambda b, m, h: (h, 0, 0)),
                pl.BlockSpec((1, C), lambda b, m, h: (0, 0)),
            ],
            out_specs=pl.BlockSpec((1, tq, C), lambda b, m, h: (b, m, 0)),
            scratch_shapes=[pltpu.VMEM((tq, C), jnp.float32)],
        ),
        compiler_params=cparams(("parallel", "parallel", "arbitrary")),
    )(y_heads, w_proj_heads, bias)

    return out


def pack_weights(wq, wk, wv, wp, *, n_embd):
    """Pack per-head weights (already transposed so y = x @ w) for the kernels."""
    H, C, hs = wq.shape
    scale = n_embd ** (-0.5)
    # Fold the softmax scale into the q columns (one-time weight transform).
    w_qkv_heads = jnp.concatenate([wq * scale, wk, wv], axis=-1).astype(jnp.bfloat16)
    w_proj_heads = wp.reshape(H, hs, C).astype(jnp.bfloat16)
    return w_qkv_heads, w_proj_heads


def _reference(x, wq, wk, wv, wp, bias):
    """Pure-JAX f32 reference mirroring the PyTorch forward."""
    B, T, C = x.shape
    n_head = wq.shape[0]
    tril = jnp.tril(jnp.ones((T, T)))
    outs = []
    for h in range(n_head):
        q = x @ wq[h]
        k = x @ wk[h]
        v = x @ wv[h]
        att = (q @ jnp.swapaxes(k, -1, -2)) * C ** (-0.5)
        att = jnp.where(tril == 0, -jnp.inf, att)
        att = jax.nn.softmax(att, axis=-1)
        outs.append(att @ v)
    cat = jnp.concatenate(outs, axis=-1)
    return cat @ wp + bias[0]


if __name__ == "__main__":
    # config: n_embd=32, n_head=4, block_size=8 (=> head_size=8); batch B=2, T=8
    B, T, C, n_head = 2, 8, 32, 4
    hs = C // n_head

    key = jax.random.PRNGKey(0)
    kx, kq, kk, kv, kp, kb = jax.random.split(key, 6)

    bound = 1.0 / math.sqrt(C)
    # Per-head weights already transposed so q = x @ wq[h]  (wq[h] = Linear.weight.T).
    wq = jax.random.uniform(kq, (n_head, C, hs), jnp.float32, -bound, bound)
    wk = jax.random.uniform(kk, (n_head, C, hs), jnp.float32, -bound, bound)
    wv = jax.random.uniform(kv, (n_head, C, hs), jnp.float32, -bound, bound)
    # proj: nn.Linear(C, C); wp = proj.weight.T so out = cat @ wp + bias.
    wp = jax.random.uniform(kp, (C, C), jnp.float32, -bound, bound)
    bias = jax.random.uniform(kb, (1, C), jnp.float32, -bound, bound)
    x = jax.random.normal(kx, (B, T, C), jnp.float32)

    w_qkv_heads, w_proj_heads = pack_weights(wq, wk, wv, wp, n_embd=C)

    out = multi_head_attention(x, w_qkv_heads, w_proj_heads, bias)
    out = jax.block_until_ready(out)

    ref = _reference(x, wq, wk, wv, wp, bias)
    # bf16 matmul operands / bf16 intermediates + approx reciprocal => bf16-level tolerance.
    np.testing.assert_allclose(np.asarray(out), np.asarray(ref), rtol=2e-2, atol=2e-2)

    print("KERNEL_OK")
</pallas_src>

<mosaic_0001>
module attributes {stable_mosaic.version = 11 : i64} {
  func.func @_qkv_proj_kernel(%arg0: i32, %arg1: i32, %arg2: i32, %arg3: memref<1x8x32xbf16, #tpu.memory_space<vmem>>, %arg4: memref<1x32x24xbf16, #tpu.memory_space<vmem>>, %arg5: memref<1x1x8x8xbf16, #tpu.memory_space<vmem>>, %arg6: memref<1x1x8x8xbf16, #tpu.memory_space<vmem>>, %arg7: memref<1x1x8x8xbf16, #tpu.memory_space<vmem>>) attributes {dimension_semantics = [#tpu.dimension_semantics<parallel>, #tpu.dimension_semantics<parallel>, #tpu.dimension_semantics<parallel>], iteration_bounds = array<i64: 2, 4, 1>, scalar_prefetch = 0 : i64, scratch_operands = 0 : i64, tpu.core_type = #tpu.core_type<tc>, window_params = [{transform_indices = @transform_0, window_bounds = array<i64: 1, 8, 32>}, {transform_indices = @transform_1, window_bounds = array<i64: 1, 32, 24>}, {transform_indices = @transform_2, window_bounds = array<i64: 1, 1, 8, 8>}, {transform_indices = @transform_3, window_bounds = array<i64: 1, 1, 8, 8>}, {transform_indices = @transform_4, window_bounds = array<i64: 1, 1, 8, 8>}]} {
    %c0 = arith.constant 0 : index
    %c0_0 = arith.constant 0 : index
    %c0_1 = arith.constant 0 : index
    %0 = vector.load %arg3[%c0, %c0_0, %c0_1] : memref<1x8x32xbf16, #tpu.memory_space<vmem>>, vector<1x8x32xbf16>
    %1 = vector.shape_cast %0 : vector<1x8x32xbf16> to vector<8x32xbf16>
    %c0_2 = arith.constant 0 : index
    %c0_3 = arith.constant 0 : index
    %c0_4 = arith.constant 0 : index
    %2 = vector.load %arg4[%c0_2, %c0_3, %c0_4] : memref<1x32x24xbf16, #tpu.memory_space<vmem>>, vector<1x32x24xbf16>
    %3 = vector.shape_cast %2 : vector<1x32x24xbf16> to vector<32x24xbf16>
    %cst = arith.constant dense<0.000000e+00> : vector<8x24xf32>
    %4 = tpu.matmul %1, %3, %cst {dimension_numbers = #tpu.dot_dimension_numbers<[1], [0], [0], [1], [0, 0, 1, 1], [], []>} : vector<8x32xbf16>, vector<32x24xbf16>, vector<8x24xf32> -> vector<8x24xf32>
    %5 = vector.extract_strided_slice %4 {offsets = [0, 0], sizes = [8, 8], strides = [1, 1]} : vector<8x24xf32> to vector<8x8xf32>
    %6 = arith.truncf %5 : vector<8x8xf32> to vector<8x8xbf16>
    %c0_5 = arith.constant 0 : index
    %c0_6 = arith.constant 0 : index
    %c0_7 = arith.constant 0 : index
    %c0_8 = arith.constant 0 : index
    %7 = vector.load %arg5[%c0_5, %c0_6, %c0_7, %c0_8] : memref<1x1x8x8xbf16, #tpu.memory_space<vmem>>, vector<1x1x8x8xbf16>
    %8 = vector.shape_cast %7 : vector<1x1x8x8xbf16> to vector<8x8xbf16>
    %9 = vector.shape_cast %6 : vector<8x8xbf16> to vector<1x1x8x8xbf16>
    tpu.vector_store %arg5[%c0_5, %c0_6, %c0_7, %c0_8], %9 {strides = array<i32>} : memref<1x1x8x8xbf16, #tpu.memory_space<vmem>>, vector<1x1x8x8xbf16>,
    %10 = vector.extract_strided_slice %4 {offsets = [0, 8], sizes = [8, 8], strides = [1, 1]} : vector<8x24xf32> to vector<8x8xf32>
    %11 = arith.truncf %10 : vector<8x8xf32> to vector<8x8xbf16>
    %c0_9 = arith.constant 0 : index
    %c0_10 = arith.constant 0 : index
    %c0_11 = arith.constant 0 : index
    %c0_12 = arith.constant 0 : index
    %12 = vector.load %arg6[%c0_9, %c0_10, %c0_11, %c0_12] : memref<1x1x8x8xbf16, #tpu.memory_space<vmem>>, vector<1x1x8x8xbf16>
    %13 = vector.shape_cast %12 : vector<1x1x8x8xbf16> to vector<8x8xbf16>
    %14 = vector.shape_cast %11 : vector<8x8xbf16> to vector<1x1x8x8xbf16>
    tpu.vector_store %arg6[%c0_9, %c0_10, %c0_11, %c0_12], %14 {strides = array<i32>} : memref<1x1x8x8xbf16, #tpu.memory_space<vmem>>, vector<1x1x8x8xbf16>,
    %15 = vector.extract_strided_slice %4 {offsets = [0, 16], sizes = [8, 8], strides = [1, 1]} : vector<8x24xf32> to vector<8x8xf32>
    %16 = arith.truncf %15 : vector<8x8xf32> to vector<8x8xbf16>
    %c0_13 = arith.constant 0 : index
    %c0_14 = arith.constant 0 : index
    %c0_15 = arith.constant 0 : index
    %c0_16 = arith.constant 0 : index
    %17 = vector.load %arg7[%c0_13, %c0_14, %c0_15, %c0_16] : memref<1x1x8x8xbf16, #tpu.memory_space<vmem>>, vector<1x1x8x8xbf16>
    %18 = vector.shape_cast %17 : vector<1x1x8x8xbf16> to vector<8x8xbf16>
    %19 = vector.shape_cast %16 : vector<8x8xbf16> to vector<1x1x8x8xbf16>
    tpu.vector_store %arg7[%c0_13, %c0_14, %c0_15, %c0_16], %19 {strides = array<i32>} : memref<1x1x8x8xbf16, #tpu.memory_space<vmem>>, vector<1x1x8x8xbf16>,
    return
  }
  func.func @transform_0(%arg0: i32, %arg1: i32, %arg2: i32) -> (i32, i32, i32) {
    %c0_i32 = arith.constant 0 : i32
    %c0_i32_0 = arith.constant 0 : i32
    return %arg0, %arg2, %c0_i32 : i32, i32, i32
  }
  func.func @transform_1(%arg0: i32, %arg1: i32, %arg2: i32) -> (i32, i32, i32) {
    %c0_i32 = arith.constant 0 : i32
    %c0_i32_0 = arith.constant 0 : i32
    %c0_i32_1 = arith.constant 0 : i32
    return %arg1, %c0_i32, %c0_i32_0 : i32, i32, i32
  }
  func.func @transform_2(%arg0: i32, %arg1: i32, %arg2: i32) -> (i32, i32, i32, i32) {
    %c0_i32 = arith.constant 0 : i32
    %c0_i32_0 = arith.constant 0 : i32
    return %arg0, %arg1, %arg2, %c0_i32 : i32, i32, i32, i32
  }
  func.func @transform_3(%arg0: i32, %arg1: i32, %arg2: i32) -> (i32, i32, i32, i32) {
    %c0_i32 = arith.constant 0 : i32
    %c0_i32_0 = arith.constant 0 : i32
    return %arg0, %arg1, %arg2, %c0_i32 : i32, i32, i32, i32
  }
  func.func @transform_4(%arg0: i32, %arg1: i32, %arg2: i32) -> (i32, i32, i32, i32) {
    %c0_i32 = arith.constant 0 : i32
    %c0_i32_0 = arith.constant 0 : i32
    return %arg0, %arg1, %arg2, %c0_i32 : i32, i32, i32, i32
  }
}

</mosaic_0001>

<llo_original>
// kernel: tpu_custom_call.1
$region0: #{tpu_custom_call.1}
  #allocation0 [shape = 'u32[]', space=smem, size = 0x4, offset = 0x4, fixed_abs, tag = 'smem constant byte address 0x4 - core index']
  #allocation1 [shape = 'u32[144,128]{1,0:T(1,128)}', space=vmem, size = 0x12000, scoped, tag = 'internal scratch']
  %s0 = inlined_call_operand.hbm [shape: bf16[2,8,32], index: 0, kind: input, shape index: {}]
  %s1 = inlined_call_operand.hbm [shape: bf16[4,32,24], index: 1, kind: input, shape index: {}]
  %s2 = inlined_call_operand.hbm [shape: bf16[2,4,8,8], index: 2, kind: output, shape index: {0}]
  %s3 = inlined_call_operand.hbm [shape: bf16[2,4,8,8], index: 3, kind: output, shape index: {1}]
  %s4 = inlined_call_operand.hbm [shape: bf16[2,4,8,8], index: 4, kind: output, shape index: {2}]
  %5 = xla_tuple %s2, %s3, %s4
  %s6 = sld [smem:[#allocation0]]
  $region65: #{tpu_custom_call.1} parent=0
    _
  %s8 = ssub.s32 1, %s6
  %s9 = scalar_select 0, %s8, %s6
  $region1: #{tpu_custom_call.1} parent=0
    #allocation2 [shape = 'u8[4096]{0}', space=vmem, size = 0x1000, scoped, tag = 'input window, operand 0']
    #allocation3 [shape = 's32[2]{0}', space=sflag, size = 0x8, scoped, tag = 'scoped memory for tpu_custom_call.1']
    #allocation4 [shape = 's32[2]{0}', space=sflag, size = 0x8, scoped, tag = 'scoped memory for tpu_custom_call.1']
    #allocation5 [shape = 'u8[16384]{0}', space=vmem, size = 0x4000, scoped, tag = 'input window, operand 1']
    #allocation6 [shape = 's32[2]{0}', space=sflag, size = 0x8, scoped, tag = 'scoped memory for tpu_custom_call.1']
    #allocation7 [shape = 'u8[4096]{0}', space=vmem, size = 0x1000, scoped, tag = 'output window, operand 0']
    #allocation8 [shape = 'u8[4096]{0}', space=vmem, size = 0x1000, scoped, tag = 'output window, operand 1']
    #allocation9 [shape = 's32[2]{0}', space=sflag, size = 0x8, scoped, tag = 'scoped memory for tpu_custom_call.1']
    #allocation10 [shape = 'u8[4096]{0}', space=vmem, size = 0x1000, scoped, tag = 'output window, operand 2']
    %10 = vsyncpa [#allocation3], 0
    %s11 = scalar_lea.sflag [#allocation3], 1
    %12 = vsyncpa %s11, 0
    %13 = vsyncpa [#allocation6], 0
    %s14 = scalar_lea.sflag [#allocation6], 1
    %15 = vsyncpa %s14, 0
    %16 = vsyncpa [#allocation4], 0
    %s17 = scalar_lea.sflag [#allocation4], 1
    %18 = vsyncpa %s17, 0
    %19 = vsyncpa [#allocation9], 0
    %s20 = scalar_lea.sflag [#allocation9], 1
    %21 = vsyncpa %s20, 0
    loop: start=0, step=1, limit=10
    $region2: #{tpu_custom_call.1} parent=1 // loop_pre_header
      _
    $region3: #{tpu_custom_call.1} parent=1 // loop_header
      %s23 = sphi 0, %s27
      %p24 = scmp.ge.s32.totalorder %s23, 10
      %s30 = sphi 0, %s49
      %s31 = sphi 0, %s45
      %s32 = sphi 0, %s41
      %s33 = sphi 0, %s30
      %s34 = sphi 0, %s31
      %s35 = sphi 0, %s32
      %s36 = sphi 0, %s33
      %s37 = sphi 0, %s34
      %s38 = sphi 0, %s35
      %s54 = sphi 0, %s56
      %s57 = sphi 0, %s54
      %s58 = sphi 0, %s57
      %s74 = sphi 0, %s58
      %s80 = sphi 0, %s82
      %s83 = sphi 0, %s80
      %s84 = sphi 0, %s83
      %s100 = sphi 0, %s84
      %s110 = sphi 0, %s112
      %s113 = sphi 0, %s110
      %s114 = sphi 0, %s113
      %s130 = sphi 0, %s114
      %s140 = sphi 0, %s142
      %s143 = sphi 0, %s140
      %s144 = sphi 0, %s143
      %s160 = sphi 0, %s144
      %s170 = sphi 0, %s172
      %s173 = sphi 0, %s170
      %s174 = sphi 0, %s173
      %s190 = sphi 0, %s174
    $region4: #{tpu_custom_call.1} parent=1 // loop_header_branch
      %26 = sbr.rel (%p24) target = $region8
    $region5: #{tpu_custom_call.1} parent=1 // loop_body
      %s28 = ssub.s32 %s23, 1
      %s29 = ssub.s32 %s23, 2
      %s39 = sadd.s32 1, %s32
      %p40 = scmp.ge.s32.totalorder %s39, 1
      %s41 = scalar_select %p40, 0, %s39
      %s42 = sadd.s32 1, %s31
      %s43 = scalar_select %p40, %s42, %s31
      %p44 = scmp.ge.s32.totalorder %s43, 4
      %s45 = scalar_select %p44, 0, %s43
      %s46 = sadd.s32 1, %s30
      %s47 = scalar_select %p44, %s46, %s30
      %p48 = scmp.ge.s32.totalorder %s47, 2
      %s49 = scalar_select %p48, 0, %s47
      %s50 = ssub.s32 %s30, %s49
      %s51 = ssub.s32 %s32, %s41
      %s52 = sor.u32 %s50, %s51
      %p53 = scmp.eq.s32.totalorder %s52, 0
      %s55 = sadd.s32 %s54, 1
      %s56 = scalar_select %p53, %s54, %s55
      %p59 = pneg %p53
      %p60 = scmp.eq.s32.totalorder %s23, 7
      %p61 = por %p59, %p60
      %p62 = scmp.ne.s32.totalorder %s54, %s57
      %p63 = scmp.eq.s32.totalorder %s23, 0
      %p64 = por %p62, %p63
      %p65 = scmp.ne.s32.totalorder %s54, %s57
      %p66 = scmp.eq.s32.totalorder %s28, 7
      %p67 = por %p65, %p66
      %p68 = scmp.ne.s32.totalorder %s57, %s58
      %p69 = scmp.eq.s32.totalorder %s28, 0
      %p70 = por %p68, %p69
      %p71 = scmp.ne.s32.totalorder %s57, %s58
      %p72 = scmp.eq.s32.totalorder %s29, 7
      %p73 = por %p71, %p72
      %p75 = scmp.ne.s32.totalorder %s58, %s74
      %p76 = scmp.eq.s32.totalorder %s29, 0
      %p77 = por %p75, %p76
      %s78 = ssub.s32 %s31, %s45
      %p79 = scmp.eq.s32.totalorder %s78, 0
      %s81 = sadd.s32 %s80, 1
      %s82 = scalar_select %p79, %s80, %s81
      %p85 = pneg %p79
      %p86 = scmp.eq.s32.totalorder %s23, 7
      %p87 = por %p85, %p86
      %p88 = scmp.ne.s32.totalorder %s80, %s83
      %p89 = scmp.eq.s32.totalorder %s23, 0
      %p90 = por %p88, %p89
      %p91 = scmp.ne.s32.totalorder %s80, %s83
      %p92 = scmp.eq.s32.totalorder %s28, 7
      %p93 = por %p91, %p92
      %p94 = scmp.ne.s32.totalorder %s83, %s84
      %p95 = scmp.eq.s32.totalorder %s28, 0
      %p96 = por %p94, %p95
      %p97 = scmp.ne.s32.totalorder %s83, %s84
      %p98 = scmp.eq.s32.totalorder %s29, 7
      %p99 = por %p97, %p98
      %p101 = scmp.ne.s32.totalorder %s84, %s100
      %p102 = scmp.eq.s32.totalorder %s29, 0
      %p103 = por %p101, %p102
      %s104 = ssub.s32 %s30, %s49
      %s105 = ssub.s32 %s31, %s45
      %s106 = sor.u32 %s104, %s105
      %s107 = ssub.s32 %s32, %s41
      %s108 = sor.u32 %s106, %s107
      %p109 = scmp.eq.s32.totalorder %s108, 0
      %s111 = sadd.s32 %s110, 1
      %s112 = scalar_select %p109, %s110, %s111
      %p115 = pneg %p109
      %p116 = scmp.eq.s32.totalorder %s23, 7
      %p117 = por %p115, %p116
      %p118 = scmp.ne.s32.totalorder %s110, %s113
      %p119 = scmp.eq.s32.totalorder %s23, 0
      %p120 = por %p118, %p119
      %p121 = scmp.ne.s32.totalorder %s110, %s113
      %p122 = scmp.eq.s32.totalorder %s28, 7
      %p123 = por %p121, %p122
      %p124 = scmp.ne.s32.totalorder %s113, %s114
      %p125 = scmp.eq.s32.totalorder %s28, 0
      %p126 = por %p124, %p125
      %p127 = scmp.ne.s32.totalorder %s113, %s114
      %p128 = scmp.eq.s32.totalorder %s29, 7
      %p129 = por %p127, %p128
      %p131 = scmp.ne.s32.totalorder %s114, %s130
      %p132 = scmp.eq.s32.totalorder %s29, 0
      %p133 = por %p131, %p132
      %s134 = ssub.s32 %s30, %s49
      %s135 = ssub.s32 %s31, %s45
      %s136 = sor.u32 %s134, %s135
      %s137 = ssub.s32 %s32, %s41
      %s138 = sor.u32 %s136, %s137
      %p139 = scmp.eq.s32.totalorder %s138, 0
      %s141 = sadd.s32 %s140, 1
      %s142 = scalar_select %p139, %s140, %s141
      %p145 = pneg %p139
      %p146 = scmp.eq.s32.totalorder %s23, 7
      %p147 = por %p145, %p146
      %p148 = scmp.ne.s32.totalorder %s140, %s143
      %p149 = scmp.eq.s32.totalorder %s23, 0
      %p150 = por %p148, %p149
      %p151 = scmp.ne.s32.totalorder %s140, %s143
      %p152 = scmp.eq.s32.totalorder %s28, 7
      %p153 = por %p151, %p152
      %p154 = scmp.ne.s32.totalorder %s143, %s144
      %p155 = scmp.eq.s32.totalorder %s28, 0
      %p156 = por %p154, %p155
      %p157 = scmp.ne.s32.totalorder %s143, %s144
      %p158 = scmp.eq.s32.totalorder %s29, 7
      %p159 = por %p157, %p158
      %p161 = scmp.ne.s32.totalorder %s144, %s160
      %p162 = scmp.eq.s32.totalorder %s29, 0
      %p163 = por %p161, %p162
      %s164 = ssub.s32 %s30, %s49
      %s165 = ssub.s32 %s31, %s45
      %s166 = sor.u32 %s164, %s165
      %s167 = ssub.s32 %s32, %s41
      %s168 = sor.u32 %s166, %s167
      %p169 = scmp.eq.s32.totalorder %s168, 0
      %s171 = sadd.s32 %s170, 1
      %s172 = scalar_select %p169, %s170, %s171
      %p175 = pneg %p169
      %p176 = scmp.eq.s32.totalorder %s23, 7
      %p177 = por %p175, %p176
      %p178 = scmp.ne.s32.totalorder %s170, %s173
      %p179 = scmp.eq.s32.totalorder %s23, 0
      %p180 = por %p178, %p179
      %p181 = scmp.ne.s32.totalorder %s170, %s173
      %p182 = scmp.eq.s32.totalorder %s28, 7
      %p183 = por %p181, %p182
      %p184 = scmp.ne.s32.totalorder %s173, %s174
      %p185 = scmp.eq.s32.totalorder %s28, 0
      %p186 = por %p184, %p185
      %p187 = scmp.ne.s32.totalorder %s173, %s174
      %p188 = scmp.eq.s32.totalorder %s29, 7
      %p189 = por %p187, %p188
      %p191 = scmp.ne.s32.totalorder %s174, %s190
      %p192 = scmp.eq.s32.totalorder %s29, 0
      %p193 = por %p191, %p192
      %p194 = scmp.le.s32.totalorder 1, %s23
      %p195 = scmp.lt.s32.totalorder %s23, 9
      %p196 = pnand %p194, %p195
      %p197 = pneg %p196
      // Predicated region
      $region9: #{tpu_custom_call.1} parent=5 // pred_check
        _
      $region10: #{tpu_custom_call.1} parent=5 // pred_check_branch
        %199 = sbr.rel (%p196) target = $region12
      $region11: #{tpu_custom_call.1} parent=5 // pred_region
        %s200 = ssub.s32 %s23, 1
      $region12: #{tpu_custom_call.1} parent=5 // pred_fallthru
        _
      %p201 = scmp.lt.s32.totalorder %s23, 8
      // Predicated region
      $region13: #{tpu_custom_call.1} parent=5 // pred_check
        %p202 = pneg %p201
      $region14: #{tpu_custom_call.1} parent=5 // pred_check_branch
        %204 = sbr.rel (%p202) target = $region16
      $region15: #{tpu_custom_call.1} parent=5 // pred_region
        // Predicated region
        $region17: #{tpu_custom_call.1} parent=15 // pred_check
          %p205 = pneg %p64
        $region18: #{tpu_custom_call.1} parent=15 // pred_check_branch
          %207 = sbr.rel (%p205) target = $region20
        $region19: #{tpu_custom_call.1} parent=15 // pred_region
          %s208 = sand.u32 %s54, 1
          %s209 = scalar_lea.sflag [#allocation3], %s208
          %s210 = sand.u32 %s54, 1
          %s211 = smul.addr %s210, 4
          %s212 = scalar_lea.vmem [#allocation2], %s211
          %s214 = ssub.s32 64, 64
          %215 = vsyncadd %s209, %s214
          %s216 = sadd.s32 %s32, %s30
          %s217 = smul.addr %s216, 64
          %s218 = scalar_lea.hbm %s0, %s217
          %s220 = sshll.u32 %s212, 4
          %s221 = int_to_ptr.vmem [resolvable:$true] %s220
          %223 = dma.hbm_to_vmem [thread:$0]  %s218, 64, %s221, %s209
        $region20: #{tpu_custom_call.1} parent=15 // pred_fallthru
          _
        // Predicated region
        $region21: #{tpu_custom_call.1} parent=15 // pred_check
          %p224 = pneg %p90
        $region22: #{tpu_custom_call.1} parent=15 // pred_check_branch
          %226 = sbr.rel (%p224) target = $region24
        $region23: #{tpu_custom_call.1} parent=15 // pred_region
          %s227 = sand.u32 %s80, 1
          %s228 = scalar_lea.sflag [#allocation6], %s227
          %s229 = sand.u32 %s80, 1
          %s230 = smul.addr %s229, 16
          %s231 = scalar_lea.vmem [#allocation5], %s230
          %s233 = ssub.s32 256, 256
          %234 = vsyncadd %s228, %s233
          %s235 = smul.addr %s31, 4
          %s236 = smul.addr %s235, 64
          %s237 = scalar_lea.hbm %s1, %s236
          %s238 = sshll.u32 %s231, 4
          %s239 = int_to_ptr.vmem [resolvable:$true] %s238
          %244 = dma.hbm_to_vmem [thread:$0]  %s237, 256, %s239, %s228, 64, 64, 4
        $region24: #{tpu_custom_call.1} parent=15 // pred_fallthru
          _
      $region16: #{tpu_custom_call.1} parent=5 // pred_fallthru
        _
      %p245 = scmp.le.s32.totalorder 1, %s23
      %p246 = scmp.lt.s32.totalorder %s23, 9
      %p247 = pnand %p245, %p246
      %p248 = pneg %p247
      // Predicated region
      $region25: #{tpu_custom_call.1} parent=5 // pred_check
        _
      $region26: #{tpu_custom_call.1} parent=5 // pred_check_branch
        %250 = sbr.rel (%p247) target = $region28
      $region27: #{tpu_custom_call.1} parent=5 // pred_region
        %s251 = ssub.s32 %s23, 1
        %s252 = sand.u32 %s57, 1
        %s253 = scalar_lea.sflag [#allocation3], %s252
        %s254 = sand.u32 %s57, 1
        %s255 = smul.addr %s254, 4
        %s256 = scalar_lea.vmem [#allocation2], %s255
        // Predicated region
        $region29: #{tpu_custom_call.1} parent=27 // pred_check
          %p257 = pneg %p70
        $region30: #{tpu_custom_call.1} parent=27 // pred_check_branch
          %259 = sbr.rel (%p257) target = $region32
        $region31: #{tpu_custom_call.1} parent=27 // pred_region
          %260 = dma.done %s253, 64
        $region32: #{tpu_custom_call.1} parent=27 // pred_fallthru
          _
        %s261 = sand.u32 %s83, 1
        %s262 = scalar_lea.sflag [#allocation6], %s261
        %s263 = sand.u32 %s83, 1
        %s264 = smul.addr %s263, 16
        %s265 = scalar_lea.vmem [#allocation5], %s264
        // Predicated region
        $region33: #{tpu_custom_call.1} parent=27 // pred_check
          %p266 = pneg %p96
        $region34: #{tpu_custom_call.1} parent=27 // pred_check_branch
          %268 = sbr.rel (%p266) target = $region36
        $region35: #{tpu_custom_call.1} parent=27 // pred_region
          %269 = dma.done %s262, 256
        $region36: #{tpu_custom_call.1} parent=27 // pred_fallthru
          _
        %s270 = sand.u32 %s57, 1
        %s271 = scalar_lea.sflag [#allocation3], %s270
        %s272 = sand.u32 %s57, 1
        %s273 = smul.addr %s272, 4
        %s274 = scalar_lea.vmem [#allocation2], %s273
        %p275 = pneg %p70
        %p276 = pneg %p67
        %s277 = sand.u32 %s83, 1
        %s278 = scalar_lea.sflag [#allocation6], %s277
        %s279 = sand.u32 %s83, 1
        %s280 = smul.addr %s279, 16
        %s281 = scalar_lea.vmem [#allocation5], %s280
        %p282 = pneg %p96
        %p283 = pneg %p93
        %p284 = pneg %p126
        %p285 = pneg %p123
        %s286 = sand.u32 %s113, 1
        %s287 = scalar_lea.sflag [#allocation4], %s286
        %s288 = sand.u32 %s113, 1
        %s289 = smul.addr %s288, 4
        %s290 = scalar_lea.vmem [#allocation7], %s289
        %p291 = pneg %p156
        %p292 = pneg %p153
        %s293 = sand.u32 %s28, 1
        %s294 = scalar_lea.sflag [#allocation9], %s293
        %s295 = sand.u32 %s143, 1
        %s296 = smul.addr %s295, 4
        %s297 = scalar_lea.vmem [#allocation8], %s296
        %p298 = pneg %p186
        %p299 = pneg %p183
        %s300 = sand.u32 %s28, 1
        %s301 = scalar_lea.sflag [#allocation9], %s300
        %s302 = sand.u32 %s173, 1
        %s303 = smul.addr %s302, 4
        %s304 = scalar_lea.vmem [#allocation10], %s303
        %v306 = vld [vmem:[%s256] sm:$0xf]
        %v307 = vld [vmem:[%s265] sm:$0xf]
        %v308 = vld [vmem:[%s265 + $0x4] sm:$0xf]
        %v309 = vld [vmem:[%s265 + $0x8] sm:$0xf]
        %v310 = vld [vmem:[%s265 + $0xc] sm:$0xf]
        %v315 = vunpack.c.l.b16 %v307
        %v316 = vunpack.c.l.b16 %v308
        %v317 = vunpack.c.l.b16 %v309
        %v318 = vunpack.c.l.b16 %v310
        %v319 = vpack.c.b16 %v316, %v315
        %v320 = vpack.c.b16 %v318, %v317
        %vm323 = vcmask 261120
        %v325 = vsel %vm323, %v306, 0
        %327 = vmatprep.subr.bf16.mxu0 0
        %328 = vmatpush1.bf16.msra.mxu0 %v319
        %329 = vmatprep.subr.bf16.mxu0 0
        %330 = vmatpush1.bf16.msra.mxu0 %v320
        %331 = vmatprep.subr.bf16.mxu0 0
        %332 = vmatpush1.bf16.msra.mxu0 0
        %333 = vmatprep.subr.bf16.mxu0 0
        %334 = vmatpush1.bf16.msra.mxu0 0
        %335 = vmatprep.subr.bf16.mxu0 0
        %336 = vmatpush1.bf16.msra.mxu0 0
        %337 = vmatprep.subr.bf16.mxu0 0
        %338 = vmatpush1.bf16.msra.mxu0 0
        %339 = vmatprep.subr.bf16.mxu0 0
        %340 = vmatpush1.bf16.msra.mxu0 0
        %341 = vmatprep.subr.bf16.mxu0 0
        %342 = vmatpush1.bf16.msra.mxu0 0
        %343 = vmatprep.subr.bf16.mxu0 0
        %344 = vmatpush1.bf16.msra.mxu0 0
        %345 = vmatprep.subr.bf16.mxu0 0
        %346 = vmatpush1.bf16.msra.mxu0 0
        %347 = vmatprep.subr.bf16.mxu0 0
        %348 = vmatpush1.bf16.msra.mxu0 0
        %349 = vmatprep.subr.bf16.mxu0 0
        %350 = vmatpush1.bf16.msra.mxu0 0
        %351 = vmatprep.subr.bf16.mxu0 0
        %352 = vmatpush1.bf16.msra.mxu0 0
        %353 = vmatprep.subr.bf16.mxu0 0
        %354 = vmatpush1.bf16.msra.mxu0 0
        %355 = vmatprep.subr.bf16.mxu0 0
        %356 = vmatpush1.bf16.msra.mxu0 0
        %357 = vmatprep.subr.bf16.mxu0 0
        %358 = vmatpush1.bf16.msra.mxu0 0
        %359 = vmatprep.mubr.bf16.mxu0 0
        %360 = vmatmul.mubr.bf16.gmra.mrb[0].mxu0 %v325
        %v361 = vpop.f32.mrb[0].mxu0
        %v362 = vadd.f32 0.0, %v361
        %v363 = vpop.f32.mrb[0].mxu0
        %v364 = vpop.f32.mrb[0].mxu0
        %v365 = vpop.f32.mrb[0].mxu0
        %366 = vdwg.mxu0
        %v367 = vpack.c.bf16 %v362, %v362
        %vm368 = vcmask 60416
        %369 = vst.msk [vmem:[%s290] sm:$0xf] %vm368, %v367
        %v371 = vunpack.c.l.b16 %v367
        %v372 = vpack.c.b16 %v371, %v371
        %373 = vrot.lane.b32.xlu0 %v372, 120
        %v374 = vpop.permute.xlu0 %373
        %376 = vst.msk [vmem:[%s297] sm:$0xf] %vm368, %v374
        %377 = vrot.lane.b32.xlu0 %v372, 112
        %v378 = vpop.permute.xlu0 %377
        %380 = vst.msk [vmem:[%s304] sm:$0xf] %vm368, %v378
        %s381 = sand.u32 %s113, 1
        %s382 = scalar_lea.sflag [#allocation4], %s381
        %s383 = sand.u32 %s113, 1
        %s384 = smul.addr %s383, 4
        %s385 = scalar_lea.vmem [#allocation7], %s384
        %s386 = sand.u32 %s28, 1
        %s387 = scalar_lea.sflag [#allocation9], %s386
        %s388 = sand.u32 %s143, 1
        %s389 = smul.addr %s388, 4
        %s390 = scalar_lea.vmem [#allocation8], %s389
        %s391 = sand.u32 %s28, 1
        %s392 = scalar_lea.sflag [#allocation9], %s391
        %s393 = sand.u32 %s173, 1
        %s394 = smul.addr %s393, 4
        %s395 = scalar_lea.vmem [#allocation10], %s394
        // Predicated region
        $region37: #{tpu_custom_call.1} parent=27 // pred_check
          %p396 = pneg %p123
        $region38: #{tpu_custom_call.1} parent=27 // pred_check_branch
          %398 = sbr.rel (%p396) target = $region40
        $region39: #{tpu_custom_call.1} parent=27 // pred_region
          %s400 = ssub.s32 64, 64
          %401 = vsyncadd %s382, %s400
          %s402 = sadd.s32 %s35, %s34
          %s403 = smul.addr %s33, 4
          %s404 = sadd.s32 %s402, %s403
          %s405 = smul.addr %s404, 64
          %s406 = scalar_lea.hbm %s2, %s405
          %s408 = sshll.u32 %s385, 4
          %s409 = int_to_ptr.vmem [resolvable:$true] %s408
          %411 = dma.vmem_to_hbm [thread:$0]  %s409, 64, %s406, %s382
        $region40: #{tpu_custom_call.1} parent=27 // pred_fallthru
          _
        // Predicated region
        $region41: #{tpu_custom_call.1} parent=27 // pred_check
          %p412 = pneg %p153
        $region42: #{tpu_custom_call.1} parent=27 // pred_check_branch
          %414 = sbr.rel (%p412) target = $region44
        $region43: #{tpu_custom_call.1} parent=27 // pred_region
          %s416 = ssub.s32 64, 64
          %417 = vsyncadd %s387, %s416
          %s418 = sadd.s32 %s35, %s34
          %s419 = smul.addr %s33, 4
          %s420 = sadd.s32 %s418, %s419
          %s421 = smul.addr %s420, 64
          %s422 = scalar_lea.hbm %s3, %s421
          %s424 = sshll.u32 %s390, 4
          %s425 = int_to_ptr.vmem [resolvable:$true] %s424
          %427 = dma.vmem_to_hbm [thread:$0]  %s425, 64, %s422, %s387
        $region44: #{tpu_custom_call.1} parent=27 // pred_fallthru
          _
        // Predicated region
        $region45: #{tpu_custom_call.1} parent=27 // pred_check
          %p428 = pneg %p183
        $region46: #{tpu_custom_call.1} parent=27 // pred_check_branch
          %430 = sbr.rel (%p428) target = $region48
        $region47: #{tpu_custom_call.1} parent=27 // pred_region
          %s432 = ssub.s32 64, 64
          %433 = vsyncadd %s392, %s432
          %s434 = sadd.s32 %s35, %s34
          %s435 = smul.addr %s33, 4
          %s436 = sadd.s32 %s434, %s435
          %s437 = smul.addr %s436, 64
          %s438 = scalar_lea.hbm %s4, %s437
          %s440 = sshll.u32 %s395, 4
          %s441 = int_to_ptr.vmem [resolvable:$true] %s440
          %443 = dma.vmem_to_hbm [thread:$0]  %s441, 64, %s438, %s392
        $region48: #{tpu_custom_call.1} parent=27 // pred_fallthru
          _
      $region28: #{tpu_custom_call.1} parent=5 // pred_fallthru
        _
      %p444 = scmp.le.s32.totalorder 2, %s23
      // Predicated region
      $region49: #{tpu_custom_call.1} parent=5 // pred_check
        %p445 = pneg %p444
      $region50: #{tpu_custom_call.1} parent=5 // pred_check_branch
        %447 = sbr.rel (%p445) target = $region52
      $region51: #{tpu_custom_call.1} parent=5 // pred_region
        %s448 = ssub.s32 %s23, 2
        // Predicated region
        $region53: #{tpu_custom_call.1} parent=51 // pred_check
          %p449 = pneg %p129
        $region54: #{tpu_custom_call.1} parent=51 // pred_check_branch
          %451 = sbr.rel (%p449) target = $region56
        $region55: #{tpu_custom_call.1} parent=51 // pred_region
          %s452 = sand.u32 %s114, 1
          %s453 = scalar_lea.sflag [#allocation4], %s452
          %s454 = sand.u32 %s114, 1
          %s455 = smul.addr %s454, 4
          %s456 = scalar_lea.vmem [#allocation7], %s455
          %457 = dma.done %s453, 64
        $region56: #{tpu_custom_call.1} parent=51 // pred_fallthru
          _
        // Predicated region
        $region57: #{tpu_custom_call.1} parent=51 // pred_check
          %p458 = pneg %p159
        $region58: #{tpu_custom_call.1} parent=51 // pred_check_branch
          %460 = sbr.rel (%p458) target = $region60
        $region59: #{tpu_custom_call.1} parent=51 // pred_region
          %s461 = sand.u32 %s29, 1
          %s462 = scalar_lea.sflag [#allocation9], %s461
          %s463 = sand.u32 %s144, 1
          %s464 = smul.addr %s463, 4
          %s465 = scalar_lea.vmem [#allocation8], %s464
          %466 = dma.done %s462, 64
        $region60: #{tpu_custom_call.1} parent=51 // pred_fallthru
          _
        // Predicated region
        $region61: #{tpu_custom_call.1} parent=51 // pred_check
          %p467 = pneg %p189
        $region62: #{tpu_custom_call.1} parent=51 // pred_check_branch
          %469 = sbr.rel (%p467) target = $region64
        $region63: #{tpu_custom_call.1} parent=51 // pred_region
          %s470 = sand.u32 %s29, 1
          %s471 = scalar_lea.sflag [#allocation9], %s470
          %s472 = sand.u32 %s174, 1
          %s473 = smul.addr %s472, 4
          %s474 = scalar_lea.vmem [#allocation10], %s473
          %475 = dma.done %s471, 64
        $region64: #{tpu_custom_call.1} parent=51 // pred_fallthru
          _
      $region52: #{tpu_custom_call.1} parent=5 // pred_fallthru
        _
    $region6: #{tpu_custom_call.1} parent=1 // loop_footer
      %s27 = sadd.s32 1, %s23
    $region7: #{tpu_custom_call.1} parent=1 // loop_footer_branch
      %22 = sbr.rel target = $region3
    $region8: #{tpu_custom_call.1} parent=1 // loop_exit
      _
    %476 = vsyncpa [#allocation3], 1
    %s477 = scalar_lea.sflag [#allocation3], 1
    %478 = vsyncpa %s477, 1
    %479 = vsyncpa [#allocation6], 1
    %s480 = scalar_lea.sflag [#allocation6], 1
    %481 = vsyncpa %s480, 1
    %482 = vsyncpa [#allocation4], 1
    %s483 = scalar_lea.sflag [#allocation4], 1
    %484 = vsyncpa %s483, 1
    %485 = vsyncpa [#allocation9], 1
    %s486 = scalar_lea.sflag [#allocation9], 1
    %487 = vsyncpa %s486, 1

</llo_original>
